<compile_context>
chip_gen: v7x
topology: tpu7x:2x2x1
jax: 0.10.0
libtpu: 0.0.40
codegen_flags: <defaults>
</compile_context>

<pallas_src>
import jax
import jax.numpy as jnp
from jax.experimental import pallas as pl
from jax.experimental.pallas import tpu as pltpu

EPS = 1e-6
OUT_DIM = 5
OUT_PAD = 8   # pad output rows to a full sublane tile for unmasked stores


# ----------------------------------------------------------------------------- #
# Standalone SecondDegreeActivation kernel (the spec module itself)
# ----------------------------------------------------------------------------- #
def _sda_kernel(exp_ref, x_ref, o_ref):
    ex = exp_ref[0, 0]
    x = x_ref[...]
    base = x * x + EPS                      # > 0 always, so exp(ex*log(base)) is a valid pow
    is_two = ex == jnp.float32(2.0)

    @pl.when(is_two)                        # fast path: no EUP work at the init exponent
    def _():
        o_ref[...] = base * base

    @pl.when(jnp.logical_not(is_two))       # general learned exponent
    def _():
        o_ref[...] = jnp.exp(ex * jnp.log(base))


def second_degree_activation(x, ex, tile=2048):
    """Elementwise (x^2 + 1e-6) ** ex for any-shape float input.

    The wrapper flattens to a sublane-dense (8, n_tiles*tile) slab so every vreg is fully
    occupied regardless of the input's leading shape, and tiles the lane axis.
    """
    shape = x.shape
    x = jnp.asarray(x, jnp.float32)
    total = x.size
    rows = 8
    per_tile = rows * tile
    n_tiles = pl.cdiv(total, per_tile)
    padded = n_tiles * per_tile
    xf = jnp.pad(x.reshape(-1), (0, padded - total))
    xp = xf.reshape(rows, n_tiles * tile)

    out = pl.pallas_call(
        _sda_kernel,
        out_shape=jax.ShapeDtypeStruct((rows, n_tiles * tile), jnp.float32),
        grid=(n_tiles,),
        in_specs=[
            pl.BlockSpec((1, 1), lambda i: (0, 0), memory_space=pltpu.MemorySpace.SMEM),
            pl.BlockSpec((rows, tile), lambda i: (0, i)),
        ],
        out_specs=pl.BlockSpec((rows, tile), lambda i: (0, i)),
        compiler_params=pltpu.CompilerParams(dimension_semantics=("parallel",)),
        cost_estimate=pl.CostEstimate(
            flops=4 * padded,
            transcendentals=2 * padded,      # general-path estimate (advisory only)
            bytes_accessed=8 * padded,
        ),
    )(jnp.asarray(ex, jnp.float32).reshape(1, 1), xp)
    return out.reshape(-1)[:total].reshape(shape)


# ----------------------------------------------------------------------------- #
# Full Net forward (transposed, lane-dense layout)
# ----------------------------------------------------------------------------- #
def _linear_vpu(w, b, a, k_in):
    """z[o, t] = sum_k w[o, k] * a[k, t] + b[o, 0] using broadcast FMAs + pairwise tree sum.

    Tree accumulation cuts the dependent-add chain from (k_in - 1) to ~log2(k_in),
    per the performance review.  Exact f32 (no MXU bf16 passes).
    """
    parts = [w[:, k:k + 1] * a[k:k + 1, :] for k in range(k_in)]
    parts[0] = parts[0] + b
    while len(parts) > 1:
        nxt = [parts[i] + parts[i + 1] for i in range(0, len(parts) - 1, 2)]
        if len(parts) % 2:
            nxt.append(parts[-1])
        parts = nxt
    return parts[0]


def _net_kernel(exp_ref, x_ref, w1_ref, b1_ref, w2_ref, b2_ref, w3_ref, b3_ref, o_ref):
    """One sample tile. Shapes: x (2,T), hidden (16,T), out (8,T); weights (out,in)."""
    ex = exp_ref[0, 0]                       # SecondDegreeActivation exponent (SMEM scalar)
    a0 = jnp.sin(x_ref[...])                 # (2, T)  — chunk+sin == elementwise sin
    w1, b1 = w1_ref[...], b1_ref[...]        # (16, 2), (16, 1)
    w2, b2 = w2_ref[...], b2_ref[...]        # (16, 16), (16, 1)
    w3, b3 = w3_ref[...], b3_ref[...]        # (8, 16),  (8, 1)   rows 5..7 are zero padding

    def forward(act):
        z1 = _linear_vpu(w1, b1, a0, 2)      # Linear(2 -> 16): K=2, MXU would be ~99% padding
        a1 = act(z1)
        z2 = _linear_vpu(w2, b2, a1, 16)     # Linear(16 -> 16)
        a2 = act(z2)
        # Linear(16 -> 5), padded to 8 output rows -> full unmasked (8,128) tile store.
        o_ref[...] = _linear_vpu(w3, b3, a2, 16)

    is_two = ex == jnp.float32(2.0)

    @pl.when(is_two)                         # fast path: zero EUP ops when exp == 2.0 (init)
    def _():
        forward(lambda z: (z * z + EPS) * (z * z + EPS))

    @pl.when(jnp.logical_not(is_two))        # general path: pow via exp(ex * log(base))
    def _():
        forward(lambda z: jnp.exp(ex * jnp.log(z * z + EPS)))


def _pick_tile(n, max_tile=2048, min_tiles=2):
    """Largest-reasonable sample tile: >= min_tiles grid steps (so v7x's 2 TensorCores both
    get work), a multiple of 128 lanes, capped at max_tile (per-step VMEM stays <1 MiB)."""
    t = -(-n // min_tiles)          # cdiv
    t = -(-t // 128) * 128          # round up to a multiple of 128
    return max(128, min(t, max_tile))


def net_forward_t(xT, params, tile=None):
    """Transposed, lane-dense interface: xT (2, N) float32 -> (5, N) float32.
    No transposes inside; callers that can consume (5, N) avoid all wrapper glue."""
    w1, b1, w2, b2, w3, b3, ex = params
    N = xT.shape[1]
    if tile is None:
        tile = _pick_tile(N)
    n_tiles = pl.cdiv(N, tile)
    n_pad = n_tiles * tile

    xTp = jnp.pad(jnp.asarray(xT, jnp.float32), ((0, 0), (0, n_pad - N)))   # (2, n_pad)
    w1T, b1T = w1.T, b1.T                                                   # (16, 2), (16, 1)
    w2T, b2T = w2.T, b2.T                                                   # (16, 16), (16, 1)
    w3T = jnp.pad(w3.T, ((0, OUT_PAD - w3.shape[1]), (0, 0)))               # (8, 16)
    b3T = jnp.pad(b3.T, ((0, OUT_PAD - b3.shape[1]), (0, 0)))               # (8, 1)
    ex2 = jnp.asarray(ex, jnp.float32).reshape(1, 1)

    resident = lambda i: (0, 0)   # weights / biases stay VMEM-resident across the grid

    flops = 2 * n_pad * (2 * 16 + 16 * 16 + 16 * OUT_PAD)
    transcendentals = n_pad * (2 + 4 * 16)          # general-path upper bound (advisory)
    bytes_accessed = 4 * (n_pad * (2 + OUT_PAD) + 16 * 2 + 16 + 16 * 16 + 16
                          + OUT_PAD * 16 + OUT_PAD + 1)

    outT = pl.pallas_call(
        _net_kernel,
        out_shape=jax.ShapeDtypeStruct((OUT_PAD, n_pad), jnp.float32),
        grid=(n_tiles,),
        in_specs=[
            pl.BlockSpec((1, 1), resident, memory_space=pltpu.MemorySpace.SMEM),  # exp
            pl.BlockSpec((2, tile), lambda i: (0, i)),                            # X^T tile
            pl.BlockSpec((16, 2), resident),                                      # W1^T
            pl.BlockSpec((16, 1), resident),                                      # b1^T
            pl.BlockSpec((16, 16), resident),                                     # W2^T
            pl.BlockSpec((16, 1), resident),                                      # b2^T
            pl.BlockSpec((OUT_PAD, 16), resident),                                # W3^T (padded)
            pl.BlockSpec((OUT_PAD, 1), resident),                                 # b3^T (padded)
        ],
        out_specs=pl.BlockSpec((OUT_PAD, tile), lambda i: (0, i)),
        compiler_params=pltpu.CompilerParams(
            dimension_semantics=("parallel",),        # shard sample tiles across TCs (v7x)
            vmem_limit_bytes=32 * 1024 * 1024,        # safe on v5e / v6e / v7x
        ),
        cost_estimate=pl.CostEstimate(
            flops=flops,
            transcendentals=transcendentals,
            bytes_accessed=bytes_accessed,
        ),
    )(ex2, xTp, w1T, b1T, w2T, b2T, w3T, b3T)

    return outT[:OUT_DIM, :N]


def net_forward(X, params, tile=None):
    """Compatibility interface matching the torch module: X (N, 2) -> (N, 5)."""
    # TODO(synk): callers that can hold X transposed should call net_forward_t directly
    # and skip these two transposes (they are extra HBM passes at small N).
    return net_forward_t(jnp.asarray(X, jnp.float32).T, params, tile=tile).T


# ----------------------------------------------------------------------------- #
# Init + pure-JAX references
# ----------------------------------------------------------------------------- #
def init_params(key, layers=(2, 16, 16, 5)):
    """Mimics torch.nn.Linear default init (uniform +/- 1/sqrt(fan_in)).
    Weights stored as (in_features, out_features), biases as (1, out_features)."""
    params = []
    keys = jax.random.split(key, 2 * (len(layers) - 1))
    for i in range(len(layers) - 1):
        fan_in, fan_out = layers[i], layers[i + 1]
        bound = 1.0 / jnp.sqrt(float(fan_in))
        w = jax.random.uniform(keys[2 * i], (fan_in, fan_out),
                               minval=-bound, maxval=bound, dtype=jnp.float32)
        b = jax.random.uniform(keys[2 * i + 1], (1, fan_out),
                               minval=-bound, maxval=bound, dtype=jnp.float32)
        params.extend([w, b])
    exp = jnp.array([2.0], dtype=jnp.float32)   # SecondDegreeActivation._exp init
    return tuple(params) + (exp,)


def net_forward_ref(X, params):
    """Pure-JAX reference (full f32 matmuls for a tight numerical comparison)."""
    w1, b1, w2, b2, w3, b3, ex = params
    hp = jax.lax.Precision.HIGHEST
    a = jnp.sin(X)
    z1 = jnp.dot(a, w1, precision=hp) + b1
    a1 = jnp.power(z1 * z1 + EPS, ex[0])
    z2 = jnp.dot(a1, w2, precision=hp) + b2
    a2 = jnp.power(z2 * z2 + EPS, ex[0])
    return jnp.dot(a2, w3, precision=hp) + b3


def sda_ref(x, ex):
    return jnp.power(x * x + EPS, ex[0])


if __name__ == "__main__":
    key = jax.random.PRNGKey(0)
    k_in, k_params, k_act = jax.random.split(key, 3)

    # Collocation points matching the PINN grid (nx = ny = 50 -> N = 2500), (x, y) in [0, 1]^2.
    nx = ny = 50
    N = nx * ny
    xy = jax.random.uniform(k_in, (N, 2), minval=0.0, maxval=1.0, dtype=jnp.float32)
    params = init_params(k_params, layers=(2, 16, 16, 5))
    exp_init = params[-1]                               # 2.0 -> exercises the fast path
    exp_other = jnp.array([1.5], dtype=jnp.float32)     # exercises the general exp/log path

    # 1) Standalone SecondDegreeActivation kernel (the spec module), both exponent paths.
    h = jax.random.normal(k_act, (16, 400), dtype=jnp.float32)
    for e in (exp_init, exp_other):
        act_out = jax.block_until_ready(second_degree_activation(h, e))
        act_ref = sda_ref(h, e)
        assert act_out.shape == h.shape
        assert jnp.allclose(act_out, act_ref, atol=1e-5, rtol=1e-5), (
            f"SecondDegreeActivation mismatch (exp={float(e[0])}), max |diff| = "
            f"{float(jnp.max(jnp.abs(act_out - act_ref)))}")

    # 2) Full Net forward, exp = 2.0 (fast path, no EUP work).
    out = jax.block_until_ready(net_forward(xy, params))
    ref = net_forward_ref(xy, params)
    assert out.shape == (N, 5)
    assert jnp.allclose(out, ref, atol=1e-4, rtol=1e-4), (
        "Net forward mismatch (exp=2.0), max |diff| = "
        f"{float(jnp.max(jnp.abs(out - ref)))}")

    # 3) Full Net forward, exp = 1.5 (general exp/log path).
    params15 = params[:-1] + (exp_other,)
    out15 = jax.block_until_ready(net_forward(xy, params15))
    ref15 = net_forward_ref(xy, params15)
    assert jnp.allclose(out15, ref15, atol=1e-4, rtol=1e-4), (
        "Net forward mismatch (exp=1.5), max |diff| = "
        f"{float(jnp.max(jnp.abs(out15 - ref15)))}")

    print("KERNEL_OK")
</pallas_src>

<mosaic_0001>
module attributes {stable_mosaic.version = 11 : i64} {
  func.func @_sda_kernel(%arg0: i32, %arg1: memref<1x1xf32, #tpu.memory_space<smem>>, %arg2: memref<8x2048xf32, #tpu.memory_space<vmem>>, %arg3: memref<8x2048xf32, #tpu.memory_space<vmem>>) attributes {dimension_semantics = [#tpu.dimension_semantics<parallel>], iteration_bounds = array<i64: 1>, scalar_prefetch = 0 : i64, scratch_operands = 0 : i64, tpu.core_type = #tpu.core_type<tc>, window_params = [{transform_indices = @transform_0, window_bounds = array<i64: 1, 1>}, {transform_indices = @transform_1, window_bounds = array<i64: 8, 2048>}, {transform_indices = @transform_2, window_bounds = array<i64: 8, 2048>}]} {
    %c0 = arith.constant 0 : index
    %c0_0 = arith.constant 0 : index
    %0 = memref.load %arg1[%c0, %c0_0] : memref<1x1xf32, #tpu.memory_space<smem>>
    %c0_1 = arith.constant 0 : index
    %c0_2 = arith.constant 0 : index
    %1 = vector.load %arg2[%c0_1, %c0_2] : memref<8x2048xf32, #tpu.memory_space<vmem>>, vector<8x2048xf32>
    %2 = arith.mulf %1, %1 : vector<8x2048xf32>
    %cst = arith.constant 9.99999997E-7 : f32
    %3 = vector.broadcast %cst : f32 to vector<8x2048xf32>
    %4 = arith.addf %2, %3 : vector<8x2048xf32>
    %cst_3 = arith.constant 2.000000e+00 : f32
    %5 = arith.cmpf oeq, %0, %cst_3 : f32
    %6 = arith.extui %5 : i1 to i32
    %c0_i32 = arith.constant 0 : i32
    %7 = arith.cmpi ne, %6, %c0_i32 : i32
    scf.if %7 {
      %11 = arith.mulf %4, %4 : vector<8x2048xf32>
      %c0_5 = arith.constant 0 : index
      %c0_6 = arith.constant 0 : index
      %12 = vector.load %arg3[%c0_5, %c0_6] : memref<8x2048xf32, #tpu.memory_space<vmem>>, vector<8x2048xf32>
      tpu.vector_store %arg3[%c0_5, %c0_6], %11 {strides = array<i32>} : memref<8x2048xf32, #tpu.memory_space<vmem>>, vector<8x2048xf32>,
    } else {
    }
    %true = arith.constant true
    %8 = arith.xori %5, %true : i1
    %9 = arith.extui %8 : i1 to i32
    %c0_i32_4 = arith.constant 0 : i32
    %10 = arith.cmpi ne, %9, %c0_i32_4 : i32
    scf.if %10 {
      %11 = math.log %4 : vector<8x2048xf32>
      %12 = vector.broadcast %0 : f32 to vector<8x2048xf32>
      %13 = arith.mulf %12, %11 : vector<8x2048xf32>
      %14 = math.exp %13 : vector<8x2048xf32>
      %c0_5 = arith.constant 0 : index
      %c0_6 = arith.constant 0 : index
      %15 = vector.load %arg3[%c0_5, %c0_6] : memref<8x2048xf32, #tpu.memory_space<vmem>>, vector<8x2048xf32>
      tpu.vector_store %arg3[%c0_5, %c0_6], %14 {strides = array<i32>} : memref<8x2048xf32, #tpu.memory_space<vmem>>, vector<8x2048xf32>,
    } else {
    }
    return
  }
  func.func @transform_0(%arg0: i32) -> (i32, i32) {
    %c0_i32 = arith.constant 0 : i32
    %c0_i32_0 = arith.constant 0 : i32
    %c0_i32_1 = arith.constant 0 : i32
    return %c0_i32, %c0_i32_0 : i32, i32
  }
  func.func @transform_1(%arg0: i32) -> (i32, i32) {
    %c0_i32 = arith.constant 0 : i32
    %c0_i32_0 = arith.constant 0 : i32
    return %c0_i32, %arg0 : i32, i32
  }
  func.func @transform_2(%arg0: i32) -> (i32, i32) {
    %c0_i32 = arith.constant 0 : i32
    %c0_i32_0 = arith.constant 0 : i32
    return %c0_i32, %arg0 : i32, i32
  }
}

</mosaic_0001>

<llo_original>
// kernel: tpu_custom_call.1
$region0: #{tpu_custom_call.1}
  #allocation0 [shape = 'u32[]', space=smem, size = 0x4, offset = 0x4, fixed_abs, tag = 'smem constant byte address 0x4 - core index']
  #allocation1 [shape = 'u32[144,128]{1,0:T(1,128)}', space=vmem, size = 0x12000, scoped, tag = 'internal scratch']
  #allocation2 [shape = 'f32[1,1]{1,0:T(1,128)S(6)}', space=smem, size = 0x200, scoped, tag = 'scoped memory for tpu_custom_call.1']
  %s0 = inlined_call_operand.<no memory space> [shape: f32[1,1], index: 0, kind: input, shape index: {}]
  %s1 = inlined_call_operand.hbm [shape: f32[8,2048], index: 1, kind: input, shape index: {}]
  %s2 = inlined_call_operand.hbm [shape: f32[8,2048], index: 2, kind: output, shape index: {}]
  %s3 = sld [smem:[#allocation0]]
  $region30: #{tpu_custom_call.1} parent=0
    _
  %s5 = ssub.s32 1, %s3
  %s6 = scalar_select 0, %s5, %s3
  %7 = sst [smem:[#allocation2]] %s0
  $region1: #{tpu_custom_call.1} parent=0
    #allocation3 [shape = 'u8[65536]{0}', space=vmem, size = 0x10000, scoped, tag = 'input window, operand 1, single buffered']
    #allocation4 [shape = 's32[1]{0}', space=sflag, size = 0x4, scoped, tag = 'scoped memory for tpu_custom_call.1']
    #allocation5 [shape = 's32[1]{0}', space=sflag, size = 0x4, scoped, tag = 'scoped memory for tpu_custom_call.1']
    #allocation6 [shape = 'u8[65536]{0}', space=vmem, size = 0x10000, scoped, tag = 'output window, operand 0, single buffered']
    %8 = vsyncpa [#allocation4], 0
    %9 = vsyncpa [#allocation5], 0
    // Predicated region
    $region2: #{tpu_custom_call.1} parent=1 // pred_check
      _
    $region3: #{tpu_custom_call.1} parent=1 // pred_check_branch
      %11 = sbr.rel (0) target = $region5
    $region4: #{tpu_custom_call.1} parent=1 // pred_region
      _
    $region5: #{tpu_custom_call.1} parent=1 // pred_fallthru
      _
    // Predicated region
    $region6: #{tpu_custom_call.1} parent=1 // pred_check
      _
    $region7: #{tpu_custom_call.1} parent=1 // pred_check_branch
      %13 = sbr.rel (0) target = $region9
    $region8: #{tpu_custom_call.1} parent=1 // pred_region
      %s15 = ssub.s32 2048, 2048
      %16 = vsyncadd [#allocation4], %s15
      %s18 = sshll.u32 [#allocation3], 4
      %s19 = int_to_ptr.vmem [resolvable:$true] %s18
      %21 = dma.hbm_to_vmem [thread:$0]  %s1, 2048, %s19, [#allocation4]
    $region9: #{tpu_custom_call.1} parent=1 // pred_fallthru
      _
    // Predicated region
    $region10: #{tpu_custom_call.1} parent=1 // pred_check
      _
    $region11: #{tpu_custom_call.1} parent=1 // pred_check_branch
      %23 = sbr.rel (0) target = $region13
    $region12: #{tpu_custom_call.1} parent=1 // pred_region
      %24 = dma.done [#allocation4], 2048
    $region13: #{tpu_custom_call.1} parent=1 // pred_fallthru
      _
    %s25 = sld [smem:[#allocation2]]
    %v26 = vld [vmem:[#allocation3] sm:$0xff]
    %v27 = vld [vmem:[#allocation3 + $0x8] sm:$0xff]
    %v28 = vld [vmem:[#allocation3 + $0x10] sm:$0xff]
    %v29 = vld [vmem:[#allocation3 + $0x18] sm:$0xff]
    %v30 = vld [vmem:[#allocation3 + $0x20] sm:$0xff]
    %v31 = vld [vmem:[#allocation3 + $0x28] sm:$0xff]
    %v32 = vld [vmem:[#allocation3 + $0x30] sm:$0xff]
    %v33 = vld [vmem:[#allocation3 + $0x38] sm:$0xff]
    %v34 = vld [vmem:[#allocation3 + $0x40] sm:$0xff]
    %v35 = vld [vmem:[#allocation3 + $0x48] sm:$0xff]
    %v36 = vld [vmem:[#allocation3 + $0x50] sm:$0xff]
    %v37 = vld [vmem:[#allocation3 + $0x58] sm:$0xff]
    %v38 = vld [vmem:[#allocation3 + $0x60] sm:$0xff]
    %v39 = vld [vmem:[#allocation3 + $0x68] sm:$0xff]
    %v40 = vld [vmem:[#allocation3 + $0x70] sm:$0xff]
    %v41 = vld [vmem:[#allocation3 + $0x78] sm:$0xff]
    %v42 = vmul.f32 %v26, %v26
    %v43 = vmul.f32 %v27, %v27
    %v44 = vmul.f32 %v28, %v28
    %v45 = vmul.f32 %v29, %v29
    %v46 = vmul.f32 %v30, %v30
    %v47 = vmul.f32 %v31, %v31
    %v48 = vmul.f32 %v32, %v32
    %v49 = vmul.f32 %v33, %v33
    %v50 = vmul.f32 %v34, %v34
    %v51 = vmul.f32 %v35, %v35
    %v52 = vmul.f32 %v36, %v36
    %v53 = vmul.f32 %v37, %v37
    %v54 = vmul.f32 %v38, %v38
    %v55 = vmul.f32 %v39, %v39
    %v56 = vmul.f32 %v40, %v40
    %v57 = vmul.f32 %v41, %v41
    %v58 = vadd.f32 %v42, 1e-06
    %v59 = vadd.f32 %v43, 1e-06
    %v60 = vadd.f32 %v44, 1e-06
    %v61 = vadd.f32 %v45, 1e-06
    %v62 = vadd.f32 %v46, 1e-06
    %v63 = vadd.f32 %v47, 1e-06
    %v64 = vadd.f32 %v48, 1e-06
    %v65 = vadd.f32 %v49, 1e-06
    %v66 = vadd.f32 %v50, 1e-06
    %v67 = vadd.f32 %v51, 1e-06
    %v68 = vadd.f32 %v52, 1e-06
    %v69 = vadd.f32 %v53, 1e-06
    %v70 = vadd.f32 %v54, 1e-06
    %v71 = vadd.f32 %v55, 1e-06
    %v72 = vadd.f32 %v56, 1e-06
    %v73 = vadd.f32 %v57, 1e-06
    %p74 = scmp.eq.f32.partialorder %s25, 2.0
    // Predicated region
    $region14: #{tpu_custom_call.1} parent=1 // pred_check
      %p75 = pneg %p74
    $region15: #{tpu_custom_call.1} parent=1 // pred_check_branch
      %77 = sbr.rel (%p75) target = $region17
    $region16: #{tpu_custom_call.1} parent=1 // pred_region
      %v78 = vmul.f32 %v58, %v58
      %v79 = vmul.f32 %v59, %v59
      %v80 = vmul.f32 %v60, %v60
      %v81 = vmul.f32 %v61, %v61
      %v82 = vmul.f32 %v62, %v62
      %v83 = vmul.f32 %v63, %v63
      %v84 = vmul.f32 %v64, %v64
      %v85 = vmul.f32 %v65, %v65
      %v86 = vmul.f32 %v66, %v66
      %v87 = vmul.f32 %v67, %v67
      %v88 = vmul.f32 %v68, %v68
      %v89 = vmul.f32 %v69, %v69
      %v90 = vmul.f32 %v70, %v70
      %v91 = vmul.f32 %v71, %v71
      %v92 = vmul.f32 %v72, %v72
      %v93 = vmul.f32 %v73, %v73
      %94 = vst [vmem:[#allocation6] sm:$0xff] %v78
      %95 = vst [vmem:[#allocation6 + $0x8] sm:$0xff] %v79
      %96 = vst [vmem:[#allocation6 + $0x10] sm:$0xff] %v80
      %97 = vst [vmem:[#allocation6 + $0x18] sm:$0xff] %v81
      %98 = vst [vmem:[#allocation6 + $0x20] sm:$0xff] %v82
      %99 = vst [vmem:[#allocation6 + $0x28] sm:$0xff] %v83
      %100 = vst [vmem:[#allocation6 + $0x30] sm:$0xff] %v84
      %101 = vst [vmem:[#allocation6 + $0x38] sm:$0xff] %v85
      %102 = vst [vmem:[#allocation6 + $0x40] sm:$0xff] %v86
      %103 = vst [vmem:[#allocation6 + $0x48] sm:$0xff] %v87
      %104 = vst [vmem:[#allocation6 + $0x50] sm:$0xff] %v88
      %105 = vst [vmem:[#allocation6 + $0x58] sm:$0xff] %v89
      %106 = vst [vmem:[#allocation6 + $0x60] sm:$0xff] %v90
      %107 = vst [vmem:[#allocation6 + $0x68] sm:$0xff] %v91
      %108 = vst [vmem:[#allocation6 + $0x70] sm:$0xff] %v92
      %109 = vst [vmem:[#allocation6 + $0x78] sm:$0xff] %v93
    $region17: #{tpu_custom_call.1} parent=1 // pred_fallthru
      _
    %p110 = pneg %p74
    // Predicated region
    $region18: #{tpu_custom_call.1} parent=1 // pred_check
      _
    $region19: #{tpu_custom_call.1} parent=1 // pred_check_branch
      %112 = sbr.rel (%p74) target = $region21
    $region20: #{tpu_custom_call.1} parent=1 // pred_region
      %v113 = vlog2.pop %v58
      %v114 = vmul.f32 %v113, 0.6931472
      %v115 = vlog2.pop %v59
      %v116 = vmul.f32 %v115, 0.6931472
      %v117 = vlog2.pop %v60
      %v118 = vmul.f32 %v117, 0.6931472
      %v119 = vlog2.pop %v61
      %v120 = vmul.f32 %v119, 0.6931472
      %v121 = vlog2.pop %v62
      %v122 = vmul.f32 %v121, 0.6931472
      %v123 = vlog2.pop %v63
      %v124 = vmul.f32 %v123, 0.6931472
      %v125 = vlog2.pop %v64
      %v126 = vmul.f32 %v125, 0.6931472
      %v127 = vlog2.pop %v65
      %v128 = vmul.f32 %v127, 0.6931472
      %v129 = vlog2.pop %v66
      %v130 = vmul.f32 %v129, 0.6931472
      %v131 = vlog2.pop %v67
      %v132 = vmul.f32 %v131, 0.6931472
      %v133 = vlog2.pop %v68
      %v134 = vmul.f32 %v133, 0.6931472
      %v135 = vlog2.pop %v69
      %v136 = vmul.f32 %v135, 0.6931472
      %v137 = vlog2.pop %v70
      %v138 = vmul.f32 %v137, 0.6931472
      %v139 = vlog2.pop %v71
      %v140 = vmul.f32 %v139, 0.6931472
      %v141 = vlog2.pop %v72
      %v142 = vmul.f32 %v141, 0.6931472
      %v143 = vlog2.pop %v73
      %v144 = vmul.f32 %v143, 0.6931472
      %v145 = vstv %s25
      %v146 = vmul.f32 %v145, %v114
      %v147 = vmul.f32 %v145, %v116
      %v148 = vmul.f32 %v145, %v118
      %v149 = vmul.f32 %v145, %v120
      %v150 = vmul.f32 %v145, %v122
      %v151 = vmul.f32 %v145, %v124
      %v152 = vmul.f32 %v145, %v126
      %v153 = vmul.f32 %v145, %v128
      %v154 = vmul.f32 %v145, %v130
      %v155 = vmul.f32 %v145, %v132
      %v156 = vmul.f32 %v145, %v134
      %v157 = vmul.f32 %v145, %v136
      %v158 = vmul.f32 %v145, %v138
      %v159 = vmul.f32 %v145, %v140
      %v160 = vmul.f32 %v145, %v142
      %v161 = vmul.f32 %v145, %v144
      %v162 = vmul.f32 %v146, 1.442695
      %v163 = vpow.pop %v162
      %v164 = vmul.f32 %v147, 1.442695
      %v165 = vpow.pop %v164
      %v166 = vmul.f32 %v148, 1.442695
      %v167 = vpow.pop %v166
      %v168 = vmul.f32 %v149, 1.442695
      %v169 = vpow.pop %v168
      %v170 = vmul.f32 %v150, 1.442695
      %v171 = vpow.pop %v170
      %v172 = vmul.f32 %v151, 1.442695
      %v173 = vpow.pop %v172
      %v174 = vmul.f32 %v152, 1.442695
      %v175 = vpow.pop %v174
      %v176 = vmul.f32 %v153, 1.442695
      %v177 = vpow.pop %v176
      %v178 = vmul.f32 %v154, 1.442695
      %v179 = vpow.pop %v178
      %v180 = vmul.f32 %v155, 1.442695
      %v181 = vpow.pop %v180
      %v182 = vmul.f32 %v156, 1.442695
      %v183 = vpow.pop %v182
      %v184 = vmul.f32 %v157, 1.442695
      %v185 = vpow.pop %v184
      %v186 = vmul.f32 %v158, 1.442695
      %v187 = vpow.pop %v186
      %v188 = vmul.f32 %v159, 1.442695
      %v189 = vpow.pop %v188
      %v190 = vmul.f32 %v160, 1.442695
      %v191 = vpow.pop %v190
      %v192 = vmul.f32 %v161, 1.442695
      %v193 = vpow.pop %v192
      %194 = vst [vmem:[#allocation6] sm:$0xff] %v163
      %195 = vst [vmem:[#allocation6 + $0x8] sm:$0xff] %v165
      %196 = vst [vmem:[#allocation6 + $0x10] sm:$0xff] %v167
      %197 = vst [vmem:[#allocation6 + $0x18] sm:$0xff] %v169
      %198 = vst [vmem:[#allocation6 + $0x20] sm:$0xff] %v171
      %199 = vst [vmem:[#allocation6 + $0x28] sm:$0xff] %v173
      %200 = vst [vmem:[#allocation6 + $0x30] sm:$0xff] %v175
      %201 = vst [vmem:[#allocation6 + $0x38] sm:$0xff] %v177
      %202 = vst [vmem:[#allocation6 + $0x40] sm:$0xff] %v179
      %203 = vst [vmem:[#allocation6 + $0x48] sm:$0xff] %v181
      %204 = vst [vmem:[#allocation6 + $0x50] sm:$0xff] %v183
      %205 = vst [vmem:[#allocation6 + $0x58] sm:$0xff] %v185
      %206 = vst [vmem:[#allocation6 + $0x60] sm:$0xff] %v187
      %207 = vst [vmem:[#allocation6 + $0x68] sm:$0xff] %v189
      %208 = vst [vmem:[#allocation6 + $0x70] sm:$0xff] %v191
      %209 = vst [vmem:[#allocation6 + $0x78] sm:$0xff] %v193
    $region21: #{tpu_custom_call.1} parent=1 // pred_fallthru
      _
    // Predicated region
    $region22: #{tpu_custom_call.1} parent=1 // pred_check
      _
    $region23: #{tpu_custom_call.1} parent=1 // pred_check_branch
      %211 = sbr.rel (0) target = $region25
    $region24: #{tpu_custom_call.1} parent=1 // pred_region
      %s213 = ssub.s32 2048, 2048
      %214 = vsyncadd [#allocation5], %s213
      %s216 = sshll.u32 [#allocation6], 4
      %s217 = int_to_ptr.vmem [resolvable:$true] %s216
      %219 = dma.vmem_to_hbm [thread:$0]  %s217, 2048, %s2, [#allocation5]
    $region25: #{tpu_custom_call.1} parent=1 // pred_fallthru
      _
    // Predicated region
    $region26: #{tpu_custom_call.1} parent=1 // pred_check
      _
    $region27: #{tpu_custom_call.1} parent=1 // pred_check_branch
      %221 = sbr.rel (0) target = $region29
    $region28: #{tpu_custom_call.1} parent=1 // pred_region
      %222 = dma.done [#allocation5], 2048
    $region29: #{tpu_custom_call.1} parent=1 // pred_fallthru
      _
    %223 = vsyncpa [#allocation4], 1
    %224 = vsyncpa [#allocation5], 1

</llo_original>
